<compile_context>
chip_gen: v5e
topology: v5e:2x2
jax: 0.10.0
libtpu: 0.0.40
codegen_flags: <defaults>
</compile_context>

<pallas_src>
import jax
import jax.numpy as jnp
from jax.experimental import pallas as pl
from jax.experimental.pallas import tpu as pltpu


# ---------------- Pallas kernel ----------------------------------------------

def inception_kernel(x_ref, w1_ref, l1p_ref, rw_ref, rb_ref, o_ref,
                     xpad_ref, ppad_ref, rpad_ref, patch_ref):
    N, L, Cin = x_ref.shape
    _, Lout, C = o_ref.shape
    K = w1_ref.shape[1] // C            # 7
    pad = K // 2                        # 3
    Lp = L + 2 * pad                    # padded rows per sequence for layer1

    b1 = l1p_ref[0]                     # layer1 conv bias             (C,)
    s0 = l1p_ref[1]                     # layer1 BN scale (post-pool)  (C,)
    t0 = l1p_ref[2]                     # layer1 BN shift (post-pool)  (C,)

    # ---- zero ONLY the border rows that implement conv / pool padding -------
    zx = jnp.zeros((pad, Cin), jnp.float32)
    zc = jnp.zeros((N, 1, C), jnp.float32)
    ppad_ref[:, 0:1, :] = zc
    ppad_ref[:, L + 1:L + 2, :] = zc
    rpad_ref[:, 0:1, :] = zc                     # resblock conv borders: zeroed
    rpad_ref[:, Lout + 1:Lout + 2, :] = zc       # once, reused by all 4 convs

    # ---- layer1 Conv1d(k=7, pad=3): ONE pointwise matmul + 7 shift-adds -----
    #   y[m, k*C+co] = sum_ci xpad[m, ci] * w1[k, ci, co]
    #   conv[n, l, co] = b1[co] + sum_k y[n*Lp + l + k, k*C + co]
    for n in range(N):                           # N=2, statically unrolled
        base = n * Lp
        xpad_ref[base:base + pad, :] = zx
        xpad_ref[base + pad:base + pad + L, :] = x_ref[n]
        xpad_ref[base + pad + L:base + Lp, :] = zx

    y = jnp.dot(xpad_ref[...].astype(jnp.bfloat16), w1_ref[...],
                preferred_element_type=jnp.float32)          # (N*Lp, K*C) f32

    for n in range(N):
        base = n * Lp
        h = b1 + y[base:base + L, 0:C]                        # tap k = 0
        for k in range(1, K):                                 # taps 1..6
            h = h + y[base + k:base + k + L, k * C:(k + 1) * C]
        h = jnp.maximum(h, 0.0)                               # bias + ReLU
        ppad_ref[n:n + 1, 1:L + 1, :] = h[None]               # rows 0/L+1 stay 0

    # ---- MaxPool1d(kernel=3, stride=2, padding=1) ---------------------------
    # Zero border stands in for PyTorch's -inf pad: exact because h >= 0.
    #   m2[j] = max(h[j-1], h[j]);  pool[l] = max(m2[2l], m2[2l+1])
    m2 = jnp.maximum(ppad_ref[:, 0:L, :], ppad_ref[:, 1:L + 1, :])   # (N, L, C)
    m2 = m2.reshape(N, Lout, 2, C)                 # pair reduce, no strided reads
    p = jnp.maximum(m2[:, :, 0, :], m2[:, :, 1, :])                  # (N, Lout, C)

    # ---- layer1 BatchNorm1d (eval). ReLU + MaxPool sit between the conv and
    # this BN, so it cannot be folded into the conv weights exactly. ----------
    x = p * s0 + t0

    # ---- layer2 / layer3 residual blocks (BN folded into conv params) -------
    def conv3(inp, w, b):
        # Conv1d(k=3, pad=1) as ONE small MXU matmul on an im2col patch built
        # with three lane-offset stores (no broadcast-FMA dependency chain).
        rpad_ref[:, 1:Lout + 1, :] = inp                      # borders stay 0
        for k in range(3):
            patch_ref[:, :, k * C:(k + 1) * C] = rpad_ref[:, k:k + Lout, :]
        out = jnp.dot(patch_ref[...].reshape(N * Lout, 3 * C), w,
                      preferred_element_type=jnp.float32)     # f32 acc in MXU
        return out.reshape(N, Lout, C) + b

    for blk in range(2):
        h = conv3(x, rw_ref[2 * blk], rb_ref[2 * blk])          # conv + BN_A
        h = jnp.maximum(h, 0.0)                                 # ReLU; Dropout=id
        h = conv3(h, rw_ref[2 * blk + 1], rb_ref[2 * blk + 1])  # conv + BN_B
        x = jnp.maximum(h + x, 0.0)                             # skip add + ReLU

    o_ref[...] = x.astype(o_ref.dtype)


# ---------------- one-time parameter preparation (OFF the forward path) ------

def prepare_params(params):
    """Fold BatchNorms / repack weights once; forward() only does pallas_call."""
    K, Cin, C = params["w1"].shape
    # lane-dense layer1 weight: w1p[ci, k*C+co] = w1[k, ci, co]
    w1p = jnp.transpose(params["w1"], (1, 0, 2)).reshape(Cin, K * C)
    w1p = w1p.astype(jnp.bfloat16)
    # layer1 conv bias + post-pool BN scale/shift packed into one small ref
    l1p = jnp.stack([params["b1"], params["s0"], params["t0"]], axis=0)  # (3, C)
    # fold resblock BNs into the conv weights/biases (exact):
    #   s*(conv_w(x) + b) + t == conv_{w*s}(x) + (s*b + t)
    rs = params["rs"]                                                    # (4, C)
    rwf = (params["rw"] * rs[:, None, None, :]).reshape(4, 3 * C, C)
    rwf = rwf.astype(jnp.float32)
    rbf = (params["rb"] * rs + params["rt"]).astype(jnp.float32)         # (4, C)
    return dict(w1p=w1p, l1p=l1p.astype(jnp.float32), rwf=rwf, rbf=rbf)


# ---------------- wrapper -----------------------------------------------------

def inception_forward(x_ncl, prepped):
    """x_ncl: (N, Cin, L) like PyTorch NCL. Returns (N, C, L//2)."""
    N, Cin, L = x_ncl.shape
    assert L % 2 == 0, "MaxPool1d(3,2,1) mapping here assumes even L"
    C = prepped["rbf"].shape[1]
    K1 = prepped["w1p"].shape[1] // C
    Lout = L // 2

    # Layout plumbing only: NCL -> NLC (kernel casts to bf16 at the MXU operand).
    x_nlc = jnp.transpose(x_ncl, (0, 2, 1)).astype(jnp.float32)

    flops = (2 * (N * (L + K1 - 1)) * Cin * (K1 * C)
             + 4 * 2 * (N * Lout) * (3 * C) * C)
    bytes_accessed = (x_nlc.size * 4 + prepped["w1p"].size * 2
                      + prepped["l1p"].size * 4 + prepped["rwf"].size * 4
                      + prepped["rbf"].size * 4 + N * Lout * C * 4)

    vmem = pl.BlockSpec(memory_space=pltpu.MemorySpace.VMEM)
    out_nlc = pl.pallas_call(
        inception_kernel,
        out_shape=jax.ShapeDtypeStruct((N, Lout, C), jnp.float32),
        in_specs=[vmem] * 5,
        out_specs=vmem,
        scratch_shapes=[
            pltpu.VMEM((N * (L + K1 - 1), Cin), jnp.float32),  # layer1 conv pad
            pltpu.VMEM((N, L + 2, C), jnp.float32),            # maxpool pad
            pltpu.VMEM((N, Lout + 2, C), jnp.float32),         # resblock conv pad
            pltpu.VMEM((N, Lout, 3 * C), jnp.float32),         # resblock patches
        ],
        cost_estimate=pl.CostEstimate(flops=flops, transcendentals=0,
                                      bytes_accessed=bytes_accessed),
    )(x_nlc, prepped["w1p"], prepped["l1p"], prepped["rwf"], prepped["rbf"])

    # Final NLC -> NCL transpose kept in the wrapper: a single-vreg relayout;
    # doing it in-kernel (minor-dim transpose of a (8,3) tile) is the only
    # remaining XLA op but carries lowering risk for near-zero gain.
    return jnp.transpose(out_nlc, (0, 2, 1))


# ---------------- pure-JAX reference (correctness check) ----------------------

def _reference_forward(x_ncl, params):
    """Eval-mode reference. layer1 operands rounded to bf16 to match the
    kernel's MXU dtype; everything else f32."""
    x = jnp.transpose(x_ncl, (0, 2, 1)).astype(jnp.float32)      # (N, L, Cin)
    N, L, _ = x.shape
    K, _, C = params["w1"].shape
    pad = (K - 1) // 2

    def conv_nlc(inp, w, b, p):
        xp = jnp.pad(inp, ((0, 0), (p, p), (0, 0)))
        out = b
        for k in range(w.shape[0]):
            out = out + jnp.einsum("nlc,co->nlo",
                                   xp[:, k:k + inp.shape[1], :], w[k])
        return out

    w1 = params["w1"].astype(jnp.bfloat16).astype(jnp.float32)
    xb = x.astype(jnp.bfloat16).astype(jnp.float32)
    h = jnp.maximum(conv_nlc(xb, w1, params["b1"], pad), 0.0)
    hp = jnp.pad(h, ((0, 0), (1, 1), (0, 0)), constant_values=-jnp.inf)
    p = jnp.stack([hp[:, 2 * l:2 * l + 3, :].max(axis=1) for l in range(L // 2)],
                  axis=1)
    xcur = p * params["s0"] + params["t0"]

    for blk in range(2):
        wA, bA = params["rw"][2 * blk], params["rb"][2 * blk]
        sA, tA = params["rs"][2 * blk], params["rt"][2 * blk]
        wB, bB = params["rw"][2 * blk + 1], params["rb"][2 * blk + 1]
        sB, tB = params["rs"][2 * blk + 1], params["rt"][2 * blk + 1]
        hA = jnp.maximum(conv_nlc(xcur, wA, bA, 1) * sA + tA, 0.0)
        hB = conv_nlc(hA, wB, bB, 1) * sB + tB
        xcur = jnp.maximum(hB + xcur, 0.0)
    return jnp.transpose(xcur, (0, 2, 1))


# ---------------- deterministic parameter construction ------------------------

def init_params(key, in_channels=200, out_channels=3, eps=1e-5):
    C = out_channels
    keys = jax.random.split(key, 16)
    it = iter(keys)

    def bn_fold(k):
        kg, kb, km, kv = jax.random.split(k, 4)
        gamma = jax.random.uniform(kg, (C,), jnp.float32, 0.5, 1.5)
        beta = jax.random.normal(kb, (C,), jnp.float32) * 0.1
        mean = jax.random.normal(km, (C,), jnp.float32) * 0.1
        var = jax.random.uniform(kv, (C,), jnp.float32, 0.5, 1.5)
        scale = gamma / jnp.sqrt(var + eps)
        shift = beta - mean * scale
        return scale, shift

    # layer1 conv weight stored as (K, Cin, Cout) == transpose of torch (Cout,Cin,K)
    w1 = jax.random.normal(next(it), (7, in_channels, C), jnp.float32) * 0.05
    b1 = jax.random.normal(next(it), (C,), jnp.float32) * 0.05
    s0, t0 = bn_fold(next(it))

    rw, rb, rs, rt = [], [], [], []
    for _ in range(4):  # resblock2 conv A/B, resblock3 conv A/B
        rw.append(jax.random.normal(next(it), (3, C, C), jnp.float32) * 0.2)
        rb.append(jax.random.normal(next(it), (C,), jnp.float32) * 0.05)
        s, t = bn_fold(next(it))
        rs.append(s)
        rt.append(t)

    return dict(
        w1=w1, b1=b1, s0=s0, t0=t0,
        rw=jnp.stack(rw),    # (4, 3, C, C)
        rb=jnp.stack(rb),    # (4, C)
        rs=jnp.stack(rs),    # (4, C)
        rt=jnp.stack(rt),    # (4, C)
    )


if __name__ == "__main__":
    key = jax.random.PRNGKey(0)
    kx, kp = jax.random.split(key)

    N, Cin, L = 2, 200, 16               # matches Inception(in_channels=200)
    x = jax.random.normal(kx, (N, Cin, L), jnp.float32)
    params = init_params(kp, in_channels=Cin, out_channels=3)
    prepped = prepare_params(params)     # one-time folding, off the forward path

    fwd = jax.jit(inception_forward)
    out = jax.block_until_ready(fwd(x, prepped))

    assert out.shape == (N, 3, L // 2), out.shape
    assert bool(jnp.all(jnp.isfinite(out)))

    ref = _reference_forward(x, params)
    max_err = float(jnp.max(jnp.abs(out - ref)))
    assert max_err < 0.1, f"kernel deviates from reference: max abs err {max_err}"

    print("KERNEL_OK")
</pallas_src>

<mosaic_0001>
module attributes {stable_mosaic.version = 11 : i64} {
  func.func @inception_kernel(%arg0: memref<2x16x200xf32, #tpu.memory_space<vmem>>, %arg1: memref<200x21xbf16, #tpu.memory_space<vmem>>, %arg2: memref<3x3xf32, #tpu.memory_space<vmem>>, %arg3: memref<4x9x3xf32, #tpu.memory_space<vmem>>, %arg4: memref<4x3xf32, #tpu.memory_space<vmem>>, %arg5: memref<2x8x3xf32, #tpu.memory_space<vmem>>, %arg6: memref<44x200xf32, #tpu.memory_space<vmem>>, %arg7: memref<2x18x3xf32, #tpu.memory_space<vmem>>, %arg8: memref<2x10x3xf32, #tpu.memory_space<vmem>>, %arg9: memref<2x8x9xf32, #tpu.memory_space<vmem>>) attributes {dimension_semantics = [], scalar_prefetch = 0 : i64, scratch_operands = 4 : i64, tpu.core_type = #tpu.core_type<tc>} {
    %c0 = arith.constant 0 : index
    %c0_0 = arith.constant 0 : index
    %0 = vector.load %arg2[%c0, %c0_0] : memref<3x3xf32, #tpu.memory_space<vmem>>, vector<1x3xf32>
    %1 = vector.shape_cast %0 : vector<1x3xf32> to vector<3xf32>
    %c1 = arith.constant 1 : index
    %c0_1 = arith.constant 0 : index
    %2 = vector.load %arg2[%c1, %c0_1] : memref<3x3xf32, #tpu.memory_space<vmem>>, vector<1x3xf32>
    %3 = vector.shape_cast %2 : vector<1x3xf32> to vector<3xf32>
    %c2 = arith.constant 2 : index
    %c0_2 = arith.constant 0 : index
    %4 = vector.load %arg2[%c2, %c0_2] : memref<3x3xf32, #tpu.memory_space<vmem>>, vector<1x3xf32>
    %5 = vector.shape_cast %4 : vector<1x3xf32> to vector<3xf32>
    %cst = arith.constant 0.000000e+00 : f32
    %6 = vector.broadcast %cst : f32 to vector<3x200xf32>
    %cst_3 = arith.constant 0.000000e+00 : f32
    %7 = vector.broadcast %cst_3 : f32 to vector<2x1x3xf32>
    %c0_4 = arith.constant 0 : index
    %c0_5 = arith.constant 0 : index
    %c0_6 = arith.constant 0 : index
    %8 = vector.load %arg7[%c0_4, %c0_5, %c0_6] : memref<2x18x3xf32, #tpu.memory_space<vmem>>, vector<2x1x3xf32>
    tpu.vector_store %arg7[%c0_4, %c0_5, %c0_6], %7 {strides = array<i32>} : memref<2x18x3xf32, #tpu.memory_space<vmem>>, vector<2x1x3xf32>,
    %c0_7 = arith.constant 0 : index
    %c17 = arith.constant 17 : index
    %c0_8 = arith.constant 0 : index
    %9 = vector.load %arg7[%c0_7, %c17, %c0_8] : memref<2x18x3xf32, #tpu.memory_space<vmem>>, vector<2x1x3xf32>
    tpu.vector_store %arg7[%c0_7, %c17, %c0_8], %7 {strides = array<i32>} : memref<2x18x3xf32, #tpu.memory_space<vmem>>, vector<2x1x3xf32>,
    %c0_9 = arith.constant 0 : index
    %c0_10 = arith.constant 0 : index
    %c0_11 = arith.constant 0 : index
    %10 = vector.load %arg8[%c0_9, %c0_10, %c0_11] : memref<2x10x3xf32, #tpu.memory_space<vmem>>, vector<2x1x3xf32>
    tpu.vector_store %arg8[%c0_9, %c0_10, %c0_11], %7 {strides = array<i32>} : memref<2x10x3xf32, #tpu.memory_space<vmem>>, vector<2x1x3xf32>,
    %c0_12 = arith.constant 0 : index
    %c9 = arith.constant 9 : index
    %c0_13 = arith.constant 0 : index
    %11 = vector.load %arg8[%c0_12, %c9, %c0_13] : memref<2x10x3xf32, #tpu.memory_space<vmem>>, vector<2x1x3xf32>
    tpu.vector_store %arg8[%c0_12, %c9, %c0_13], %7 {strides = array<i32>} : memref<2x10x3xf32, #tpu.memory_space<vmem>>, vector<2x1x3xf32>,
    %c0_14 = arith.constant 0 : index
    %c0_15 = arith.constant 0 : index
    %12 = vector.load %arg6[%c0_14, %c0_15] : memref<44x200xf32, #tpu.memory_space<vmem>>, vector<3x200xf32>
    tpu.vector_store %arg6[%c0_14, %c0_15], %6 {strides = array<i32>} : memref<44x200xf32, #tpu.memory_space<vmem>>, vector<3x200xf32>,
    %c0_16 = arith.constant 0 : index
    %c0_17 = arith.constant 0 : index
    %c0_18 = arith.constant 0 : index
    %13 = vector.load %arg0[%c0_16, %c0_17, %c0_18] : memref<2x16x200xf32, #tpu.memory_space<vmem>>, vector<1x16x200xf32>
    %14 = vector.shape_cast %13 : vector<1x16x200xf32> to vector<16x200xf32>
    %c3 = arith.constant 3 : index
    %c0_19 = arith.constant 0 : index
    %15 = vector.load %arg6[%c3, %c0_19] : memref<44x200xf32, #tpu.memory_space<vmem>>, vector<16x200xf32>
    tpu.vector_store %arg6[%c3, %c0_19], %14 {strides = array<i32>} : memref<44x200xf32, #tpu.memory_space<vmem>>, vector<16x200xf32>,
    %c19 = arith.constant 19 : index
    %c0_20 = arith.constant 0 : index
    %16 = vector.load %arg6[%c19, %c0_20] : memref<44x200xf32, #tpu.memory_space<vmem>>, vector<3x200xf32>
    tpu.vector_store %arg6[%c19, %c0_20], %6 {strides = array<i32>} : memref<44x200xf32, #tpu.memory_space<vmem>>, vector<3x200xf32>,
    %c22 = arith.constant 22 : index
    %c0_21 = arith.constant 0 : index
    %17 = vector.load %arg6[%c22, %c0_21] : memref<44x200xf32, #tpu.memory_space<vmem>>, vector<3x200xf32>
    tpu.vector_store %arg6[%c22, %c0_21], %6 {strides = array<i32>} : memref<44x200xf32, #tpu.memory_space<vmem>>, vector<3x200xf32>,
    %c1_22 = arith.constant 1 : index
    %c0_23 = arith.constant 0 : index
    %c0_24 = arith.constant 0 : index
    %18 = vector.load %arg0[%c1_22, %c0_23, %c0_24] : memref<2x16x200xf32, #tpu.memory_space<vmem>>, vector<1x16x200xf32>
    %19 = vector.shape_cast %18 : vector<1x16x200xf32> to vector<16x200xf32>
    %c25 = arith.constant 25 : index
    %c0_25 = arith.constant 0 : index
    %20 = vector.load %arg6[%c25, %c0_25] : memref<44x200xf32, #tpu.memory_space<vmem>>, vector<16x200xf32>
    tpu.vector_store %arg6[%c25, %c0_25], %19 {strides = array<i32>} : memref<44x200xf32, #tpu.memory_space<vmem>>, vector<16x200xf32>,
    %c41 = arith.constant 41 : index
    %c0_26 = arith.constant 0 : index
    %21 = vector.load %arg6[%c41, %c0_26] : memref<44x200xf32, #tpu.memory_space<vmem>>, vector<3x200xf32>
    tpu.vector_store %arg6[%c41, %c0_26], %6 {strides = array<i32>} : memref<44x200xf32, #tpu.memory_space<vmem>>, vector<3x200xf32>,
    %c0_27 = arith.constant 0 : index
    %c0_28 = arith.constant 0 : index
    %22 = vector.load %arg6[%c0_27, %c0_28] : memref<44x200xf32, #tpu.memory_space<vmem>>, vector<44x200xf32>
    %23 = arith.truncf %22 : vector<44x200xf32> to vector<44x200xbf16>
    %c0_29 = arith.constant 0 : index
    %c0_30 = arith.constant 0 : index
    %24 = vector.load %arg1[%c0_29, %c0_30] : memref<200x21xbf16, #tpu.memory_space<vmem>>, vector<200x21xbf16>
    %cst_31 = arith.constant dense<0.000000e+00> : vector<44x21xf32>
    %25 = tpu.matmul %23, %24, %cst_31 {dimension_numbers = #tpu.dot_dimension_numbers<[1], [0], [0], [1], [0, 0, 1, 1], [], []>} : vector<44x200xbf16>, vector<200x21xbf16>, vector<44x21xf32> -> vector<44x21xf32>
    %26 = vector.extract_strided_slice %25 {offsets = [0, 0], sizes = [16, 3], strides = [1, 1]} : vector<44x21xf32> to vector<16x3xf32>
    %27 = vector.shape_cast %1 : vector<3xf32> to vector<1x3xf32>
    %28 = vector.broadcast %27 : vector<1x3xf32> to vector<16x3xf32>
    %29 = arith.addf %28, %26 : vector<16x3xf32>
    %30 = vector.extract_strided_slice %25 {offsets = [1, 3], sizes = [16, 3], strides = [1, 1]} : vector<44x21xf32> to vector<16x3xf32>
    %31 = arith.addf %29, %30 : vector<16x3xf32>
    %32 = vector.extract_strided_slice %25 {offsets = [2, 6], sizes = [16, 3], strides = [1, 1]} : vector<44x21xf32> to vector<16x3xf32>
    %33 = arith.addf %31, %32 : vector<16x3xf32>
    %34 = vector.extract_strided_slice %25 {offsets = [3, 9], sizes = [16, 3], strides = [1, 1]} : vector<44x21xf32> to vector<16x3xf32>
    %35 = arith.addf %33, %34 : vector<16x3xf32>
    %36 = vector.extract_strided_slice %25 {offsets = [4, 12], sizes = [16, 3], strides = [1, 1]} : vector<44x21xf32> to vector<16x3xf32>
    %37 = arith.addf %35, %36 : vector<16x3xf32>
    %38 = vector.extract_strided_slice %25 {offsets = [5, 15], sizes = [16, 3], strides = [1, 1]} : vector<44x21xf32> to vector<16x3xf32>
    %39 = arith.addf %37, %38 : vector<16x3xf32>
    %40 = vector.extract_strided_slice %25 {offsets = [6, 18], sizes = [16, 3], strides = [1, 1]} : vector<44x21xf32> to vector<16x3xf32>
    %41 = arith.addf %39, %40 : vector<16x3xf32>
    %cst_32 = arith.constant 0.000000e+00 : f32
    %42 = vector.broadcast %cst_32 : f32 to vector<16x3xf32>
    %43 = arith.maximumf %41, %42 : vector<16x3xf32>
    %44 = vector.shape_cast %43 : vector<16x3xf32> to vector<1x16x3xf32>
    %c0_33 = arith.constant 0 : index
    %c1_34 = arith.constant 1 : index
    %c0_35 = arith.constant 0 : index
    %45 = vector.load %arg7[%c0_33, %c1_34, %c0_35] : memref<2x18x3xf32, #tpu.memory_space<vmem>>, vector<1x16x3xf32>
    tpu.vector_store %arg7[%c0_33, %c1_34, %c0_35], %44 {strides = array<i32>} : memref<2x18x3xf32, #tpu.memory_space<vmem>>, vector<1x16x3xf32>,
    %46 = vector.extract_strided_slice %25 {offsets = [22, 0], sizes = [16, 3], strides = [1, 1]} : vector<44x21xf32> to vector<16x3xf32>
    %47 = vector.shape_cast %1 : vector<3xf32> to vector<1x3xf32>
    %48 = vector.broadcast %47 : vector<1x3xf32> to vector<16x3xf32>
    %49 = arith.addf %48, %46 : vector<16x3xf32>
    %50 = vector.extract_strided_slice %25 {offsets = [23, 3], sizes = [16, 3], strides = [1, 1]} : vector<44x21xf32> to vector<16x3xf32>
    %51 = arith.addf %49, %50 : vector<16x3xf32>
    %52 = vector.extract_strided_slice %25 {offsets = [24, 6], sizes = [16, 3], strides = [1, 1]} : vector<44x21xf32> to vector<16x3xf32>
    %53 = arith.addf %51, %52 : vector<16x3xf32>
    %54 = vector.extract_strided_slice %25 {offsets = [25, 9], sizes = [16, 3], strides = [1, 1]} : vector<44x21xf32> to vector<16x3xf32>
    %55 = arith.addf %53, %54 : vector<16x3xf32>
    %56 = vector.extract_strided_slice %25 {offsets = [26, 12], sizes = [16, 3], strides = [1, 1]} : vector<44x21xf32> to vector<16x3xf32>
    %57 = arith.addf %55, %56 : vector<16x3xf32>
    %58 = vector.extract_strided_slice %25 {offsets = [27, 15], sizes = [16, 3], strides = [1, 1]} : vector<44x21xf32> to vector<16x3xf32>
    %59 = arith.addf %57, %58 : vector<16x3xf32>
    %60 = vector.extract_strided_slice %25 {offsets = [28, 18], sizes = [16, 3], strides = [1, 1]} : vector<44x21xf32> to vector<16x3xf32>
    %61 = arith.addf %59, %60 : vector<16x3xf32>
    %cst_36 = arith.constant 0.000000e+00 : f32
    %62 = vector.broadcast %cst_36 : f32 to vector<16x3xf32>
    %63 = arith.maximumf %61, %62 : vector<16x3xf32>
    %64 = vector.shape_cast %63 : vector<16x3xf32> to vector<1x16x3xf32>
    %c1_37 = arith.constant 1 : index
    %c1_38 = arith.constant 1 : index
    %c0_39 = arith.constant 0 : index
    %65 = vector.load %arg7[%c1_37, %c1_38, %c0_39] : memref<2x18x3xf32, #tpu.memory_space<vmem>>, vector<1x16x3xf32>
    tpu.vector_store %arg7[%c1_37, %c1_38, %c0_39], %64 {strides = array<i32>} : memref<2x18x3xf32, #tpu.memory_space<vmem>>, vector<1x16x3xf32>,
    %c0_40 = arith.constant 0 : index
    %c0_41 = arith.constant 0 : index
    %c0_42 = arith.constant 0 : index
    %66 = vector.load %arg7[%c0_40, %c0_41, %c0_42] : memref<2x18x3xf32, #tpu.memory_space<vmem>>, vector<2x16x3xf32>
    %c0_43 = arith.constant 0 : index
    %c1_44 = arith.constant 1 : index
    %c0_45 = arith.constant 0 : index
    %67 = vector.load %arg7[%c0_43, %c1_44, %c0_45] : memref<2x18x3xf32, #tpu.memory_space<vmem>>, vector<2x16x3xf32>
    %68 = arith.maximumf %66, %67 : vector<2x16x3xf32>
    %69 = vector.shape_cast %68 : vector<2x16x3xf32> to vector<2x8x2x3xf32>
    %70 = vector.extract_strided_slice %69 {offsets = [0, 0, 0, 0], sizes = [2, 8, 1, 3], strides = [1, 1, 1, 1]} : vector<2x8x2x3xf32> to vector<2x8x1x3xf32>
    %71 = vector.shape_cast %70 : vector<2x8x1x3xf32> to vector<2x8x3xf32>
    %72 = vector.extract_strided_slice %69 {offsets = [0, 0, 1, 0], sizes = [2, 8, 1, 3], strides = [1, 1, 1, 1]} : vector<2x8x2x3xf32> to vector<2x8x1x3xf32>
    %73 = vector.shape_cast %72 : vector<2x8x1x3xf32> to vector<2x8x3xf32>
    %74 = arith.maximumf %71, %73 : vector<2x8x3xf32>
    %75 = vector.shape_cast %3 : vector<3xf32> to vector<1x1x3xf32>
    %76 = vector.broadcast %75 : vector<1x1x3xf32> to vector<2x8x3xf32>
    %77 = arith.mulf %74, %76 : vector<2x8x3xf32>
    %78 = vector.shape_cast %5 : vector<3xf32> to vector<1x1x3xf32>
    %79 = vector.broadcast %78 : vector<1x1x3xf32> to vector<2x8x3xf32>
    %80 = arith.addf %77, %79 : vector<2x8x3xf32>
    %c0_46 = arith.constant 0 : index
    %c0_47 = arith.constant 0 : index
    %c0_48 = arith.constant 0 : index
    %81 = vector.load %arg3[%c0_46, %c0_47, %c0_48] : memref<4x9x3xf32, #tpu.memory_space<vmem>>, vector<1x9x3xf32>
    %82 = vector.shape_cast %81 : vector<1x9x3xf32> to vector<9x3xf32>
    %c0_49 = arith.constant 0 : index
    %c0_50 = arith.constant 0 : index
    %83 = vector.load %arg4[%c0_49, %c0_50] : memref<4x3xf32, #tpu.memory_space<vmem>>, vector<1x3xf32>
    %84 = vector.shape_cast %83 : vector<1x3xf32> to vector<3xf32>
    %c0_51 = arith.constant 0 : index
    %c1_52 = arith.constant 1 : index
    %c0_53 = arith.constant 0 : index
    %85 = vector.load %arg8[%c0_51, %c1_52, %c0_53] : memref<2x10x3xf32, #tpu.memory_space<vmem>>, vector<2x8x3xf32>
    tpu.vector_store %arg8[%c0_51, %c1_52, %c0_53], %80 {strides = array<i32>} : memref<2x10x3xf32, #tpu.memory_space<vmem>>, vector<2x8x3xf32>,
    %c0_54 = arith.constant 0 : index
    %c0_55 = arith.constant 0 : index
    %c0_56 = arith.constant 0 : index
    %86 = vector.load %arg8[%c0_54, %c0_55, %c0_56] : memref<2x10x3xf32, #tpu.memory_space<vmem>>, vector<2x8x3xf32>
    %c0_57 = arith.constant 0 : index
    %c0_58 = arith.constant 0 : index
    %c0_59 = arith.constant 0 : index
    %87 = vector.load %arg9[%c0_57, %c0_58, %c0_59] : memref<2x8x9xf32, #tpu.memory_space<vmem>>, vector<2x8x3xf32>
    tpu.vector_store %arg9[%c0_57, %c0_58, %c0_59], %86 {strides = array<i32>} : memref<2x8x9xf32, #tpu.memory_space<vmem>>, vector<2x8x3xf32>,
    %c0_60 = arith.constant 0 : index
    %c1_61 = arith.constant 1 : index
    %c0_62 = arith.constant 0 : index
    %88 = vector.load %arg8[%c0_60, %c1_61, %c0_62] : memref<2x10x3xf32, #tpu.memory_space<vmem>>, vector<2x8x3xf32>
    %c0_63 = arith.constant 0 : index
    %c0_64 = arith.constant 0 : index
    %c3_65 = arith.constant 3 : index
    %89 = vector.load %arg9[%c0_63, %c0_64, %c3_65] : memref<2x8x9xf32, #tpu.memory_space<vmem>>, vector<2x8x3xf32>
    tpu.vector_store %arg9[%c0_63, %c0_64, %c3_65], %88 {strides = array<i32>} : memref<2x8x9xf32, #tpu.memory_space<vmem>>, vector<2x8x3xf32>,
    %c0_66 = arith.constant 0 : index
    %c2_67 = arith.constant 2 : index
    %c0_68 = arith.constant 0 : index
    %90 = vector.load %arg8[%c0_66, %c2_67, %c0_68] : memref<2x10x3xf32, #tpu.memory_space<vmem>>, vector<2x8x3xf32>
    %c0_69 = arith.constant 0 : index
    %c0_70 = arith.constant 0 : index
    %c6 = arith.constant 6 : index
    %91 = vector.load %arg9[%c0_69, %c0_70, %c6] : memref<2x8x9xf32, #tpu.memory_space<vmem>>, vector<2x8x3xf32>
    tpu.vector_store %arg9[%c0_69, %c0_70, %c6], %90 {strides = array<i32>} : memref<2x8x9xf32, #tpu.memory_space<vmem>>, vector<2x8x3xf32>,
    %c0_71 = arith.constant 0 : index
    %c0_72 = arith.constant 0 : index
    %c0_73 = arith.constant 0 : index
    %92 = vector.load %arg9[%c0_71, %c0_72, %c0_73] : memref<2x8x9xf32, #tpu.memory_space<vmem>>, vector<2x8x9xf32>
    %93 = vector.shape_cast %92 : vector<2x8x9xf32> to vector<16x9xf32>
    %cst_74 = arith.constant dense<0.000000e+00> : vector<16x3xf32>
    %94 = tpu.matmul %93, %82, %cst_74 {dimension_numbers = #tpu.dot_dimension_numbers<[1], [0], [0], [1], [0, 0, 1, 1], [], []>} : vector<16x9xf32>, vector<9x3xf32>, vector<16x3xf32> -> vector<16x3xf32>
    %95 = vector.shape_cast %94 : vector<16x3xf32> to vector<2x8x3xf32>
    %96 = vector.shape_cast %84 : vector<3xf32> to vector<1x1x3xf32>
    %97 = vector.broadcast %96 : vector<1x1x3xf32> to vector<2x8x3xf32>
    %98 = arith.addf %95, %97 : vector<2x8x3xf32>
    %cst_75 = arith.constant 0.000000e+00 : f32
    %99 = vector.broadcast %cst_75 : f32 to vector<2x8x3xf32>
    %100 = arith.maximumf %98, %99 : vector<2x8x3xf32>
    %c1_76 = arith.constant 1 : index
    %c0_77 = arith.constant 0 : index
    %c0_78 = arith.constant 0 : index
    %101 = vector.load %arg3[%c1_76, %c0_77, %c0_78] : memref<4x9x3xf32, #tpu.memory_space<vmem>>, vector<1x9x3xf32>
    %102 = vector.shape_cast %101 : vector<1x9x3xf32> to vector<9x3xf32>
    %c1_79 = arith.constant 1 : index
    %c0_80 = arith.constant 0 : index
    %103 = vector.load %arg4[%c1_79, %c0_80] : memref<4x3xf32, #tpu.memory_space<vmem>>, vector<1x3xf32>
    %104 = vector.shape_cast %103 : vector<1x3xf32> to vector<3xf32>
    %c0_81 = arith.constant 0 : index
    %c1_82 = arith.constant 1 : index
    %c0_83 = arith.constant 0 : index
    %105 = vector.load %arg8[%c0_81, %c1_82, %c0_83] : memref<2x10x3xf32, #tpu.memory_space<vmem>>, vector<2x8x3xf32>
    tpu.vector_store %arg8[%c0_81, %c1_82, %c0_83], %100 {strides = array<i32>} : memref<2x10x3xf32, #tpu.memory_space<vmem>>, vector<2x8x3xf32>,
    %c0_84 = arith.constant 0 : index
    %c0_85 = arith.constant 0 : index
    %c0_86 = arith.constant 0 : index
    %106 = vector.load %arg8[%c0_84, %c0_85, %c0_86] : memref<2x10x3xf32, #tpu.memory_space<vmem>>, vector<2x8x3xf32>
    %c0_87 = arith.constant 0 : index
    %c0_88 = arith.constant 0 : index
    %c0_89 = arith.constant 0 : index
    %107 = vector.load %arg9[%c0_87, %c0_88, %c0_89] : memref<2x8x9xf32, #tpu.memory_space<vmem>>, vector<2x8x3xf32>
    tpu.vector_store %arg9[%c0_87, %c0_88, %c0_89], %106 {strides = array<i32>} : memref<2x8x9xf32, #tpu.memory_space<vmem>>, vector<2x8x3xf32>,
    %c0_90 = arith.constant 0 : index
    %c1_91 = arith.constant 1 : index
    %c0_92 = arith.constant 0 : index
    %108 = vector.load %arg8[%c0_90, %c1_91, %c0_92] : memref<2x10x3xf32, #tpu.memory_space<vmem>>, vector<2x8x3xf32>
    %c0_93 = arith.constant 0 : index
    %c0_94 = arith.constant 0 : index
    %c3_95 = arith.constant 3 : index
    %109 = vector.load %arg9[%c0_93, %c0_94, %c3_95] : memref<2x8x9xf32, #tpu.memory_space<vmem>>, vector<2x8x3xf32>
    tpu.vector_store %arg9[%c0_93, %c0_94, %c3_95], %108 {strides = array<i32>} : memref<2x8x9xf32, #tpu.memory_space<vmem>>, vector<2x8x3xf32>,
    %c0_96 = arith.constant 0 : index
    %c2_97 = arith.constant 2 : index
    %c0_98 = arith.constant 0 : index
    %110 = vector.load %arg8[%c0_96, %c2_97, %c0_98] : memref<2x10x3xf32, #tpu.memory_space<vmem>>, vector<2x8x3xf32>
    %c0_99 = arith.constant 0 : index
    %c0_100 = arith.constant 0 : index
    %c6_101 = arith.constant 6 : index
    %111 = vector.load %arg9[%c0_99, %c0_100, %c6_101] : memref<2x8x9xf32, #tpu.memory_space<vmem>>, vector<2x8x3xf32>
    tpu.vector_store %arg9[%c0_99, %c0_100, %c6_101], %110 {strides = array<i32>} : memref<2x8x9xf32, #tpu.memory_space<vmem>>, vector<2x8x3xf32>,
    %c0_102 = arith.constant 0 : index
    %c0_103 = arith.constant 0 : index
    %c0_104 = arith.constant 0 : index
    %112 = vector.load %arg9[%c0_102, %c0_103, %c0_104] : memref<2x8x9xf32, #tpu.memory_space<vmem>>, vector<2x8x9xf32>
    %113 = vector.shape_cast %112 : vector<2x8x9xf32> to vector<16x9xf32>
    %cst_105 = arith.constant dense<0.000000e+00> : vector<16x3xf32>
    %114 = tpu.matmul %113, %102, %cst_105 {dimension_numbers = #tpu.dot_dimension_numbers<[1], [0], [0], [1], [0, 0, 1, 1], [], []>} : vector<16x9xf32>, vector<9x3xf32>, vector<16x3xf32> -> vector<16x3xf32>
    %115 = vector.shape_cast %114 : vector<16x3xf32> to vector<2x8x3xf32>
    %116 = vector.shape_cast %104 : vector<3xf32> to vector<1x1x3xf32>
    %117 = vector.broadcast %116 : vector<1x1x3xf32> to vector<2x8x3xf32>
    %118 = arith.addf %115, %117 : vector<2x8x3xf32>
    %119 = arith.addf %118, %80 : vector<2x8x3xf32>
    %cst_106 = arith.constant 0.000000e+00 : f32
    %120 = vector.broadcast %cst_106 : f32 to vector<2x8x3xf32>
    %121 = arith.maximumf %119, %120 : vector<2x8x3xf32>
    %c2_107 = arith.constant 2 : index
    %c0_108 = arith.constant 0 : index
    %c0_109 = arith.constant 0 : index
    %122 = vector.load %arg3[%c2_107, %c0_108, %c0_109] : memref<4x9x3xf32, #tpu.memory_space<vmem>>, vector<1x9x3xf32>
    %123 = vector.shape_cast %122 : vector<1x9x3xf32> to vector<9x3xf32>
    %c2_110 = arith.constant 2 : index
    %c0_111 = arith.constant 0 : index
    %124 = vector.load %arg4[%c2_110, %c0_111] : memref<4x3xf32, #tpu.memory_space<vmem>>, vector<1x3xf32>
    %125 = vector.shape_cast %124 : vector<1x3xf32> to vector<3xf32>
    %c0_112 = arith.constant 0 : index
    %c1_113 = arith.constant 1 : index
    %c0_114 = arith.constant 0 : index
    %126 = vector.load %arg8[%c0_112, %c1_113, %c0_114] : memref<2x10x3xf32, #tpu.memory_space<vmem>>, vector<2x8x3xf32>
    tpu.vector_store %arg8[%c0_112, %c1_113, %c0_114], %121 {strides = array<i32>} : memref<2x10x3xf32, #tpu.memory_space<vmem>>, vector<2x8x3xf32>,
    %c0_115 = arith.constant 0 : index
    %c0_116 = arith.constant 0 : index
    %c0_117 = arith.constant 0 : index
    %127 = vector.load %arg8[%c0_115, %c0_116, %c0_117] : memref<2x10x3xf32, #tpu.memory_space<vmem>>, vector<2x8x3xf32>
    %c0_118 = arith.constant 0 : index
    %c0_119 = arith.constant 0 : index
    %c0_120 = arith.constant 0 : index
    %128 = vector.load %arg9[%c0_118, %c0_119, %c0_120] : memref<2x8x9xf32, #tpu.memory_space<vmem>>, vector<2x8x3xf32>
    tpu.vector_store %arg9[%c0_118, %c0_119, %c0_120], %127 {strides = array<i32>} : memref<2x8x9xf32, #tpu.memory_space<vmem>>, vector<2x8x3xf32>,
    %c0_121 = arith.constant 0 : index
    %c1_122 = arith.constant 1 : index
    %c0_123 = arith.constant 0 : index
    %129 = vector.load %arg8[%c0_121, %c1_122, %c0_123] : memref<2x10x3xf32, #tpu.memory_space<vmem>>, vector<2x8x3xf32>
    %c0_124 = arith.constant 0 : index
    %c0_125 = arith.constant 0 : index
    %c3_126 = arith.constant 3 : index
    %130 = vector.load %arg9[%c0_124, %c0_125, %c3_126] : memref<2x8x9xf32, #tpu.memory_space<vmem>>, vector<2x8x3xf32>
    tpu.vector_store %arg9[%c0_124, %c0_125, %c3_126], %129 {strides = array<i32>} : memref<2x8x9xf32, #tpu.memory_space<vmem>>, vector<2x8x3xf32>,
    %c0_127 = arith.constant 0 : index
    %c2_128 = arith.constant 2 : index
    %c0_129 = arith.constant 0 : index
    %131 = vector.load %arg8[%c0_127, %c2_128, %c0_129] : memref<2x10x3xf32, #tpu.memory_space<vmem>>, vector<2x8x3xf32>
    %c0_130 = arith.constant 0 : index
    %c0_131 = arith.constant 0 : index
    %c6_132 = arith.constant 6 : index
    %132 = vector.load %arg9[%c0_130, %c0_131, %c6_132] : memref<2x8x9xf32, #tpu.memory_space<vmem>>, vector<2x8x3xf32>
    tpu.vector_store %arg9[%c0_130, %c0_131, %c6_132], %131 {strides = array<i32>} : memref<2x8x9xf32, #tpu.memory_space<vmem>>, vector<2x8x3xf32>,
    %c0_133 = arith.constant 0 : index
    %c0_134 = arith.constant 0 : index
    %c0_135 = arith.constant 0 : index
    %133 = vector.load %arg9[%c0_133, %c0_134, %c0_135] : memref<2x8x9xf32, #tpu.memory_space<vmem>>, vector<2x8x9xf32>
    %134 = vector.shape_cast %133 : vector<2x8x9xf32> to vector<16x9xf32>
    %cst_136 = arith.constant dense<0.000000e+00> : vector<16x3xf32>
    %135 = tpu.matmul %134, %123, %cst_136 {dimension_numbers = #tpu.dot_dimension_numbers<[1], [0], [0], [1], [0, 0, 1, 1], [], []>} : vector<16x9xf32>, vector<9x3xf32>, vector<16x3xf32> -> vector<16x3xf32>
    %136 = vector.shape_cast %135 : vector<16x3xf32> to vector<2x8x3xf32>
    %137 = vector.shape_cast %125 : vector<3xf32> to vector<1x1x3xf32>
    %138 = vector.broadcast %137 : vector<1x1x3xf32> to vector<2x8x3xf32>
    %139 = arith.addf %136, %138 : vector<2x8x3xf32>
    %cst_137 = arith.constant 0.000000e+00 : f32
    %140 = vector.broadcast %cst_137 : f32 to vector<2x8x3xf32>
    %141 = arith.maximumf %139, %140 : vector<2x8x3xf32>
    %c3_138 = arith.constant 3 : index
    %c0_139 = arith.constant 0 : index
    %c0_140 = arith.constant 0 : index
    %142 = vector.load %arg3[%c3_138, %c0_139, %c0_140] : memref<4x9x3xf32, #tpu.memory_space<vmem>>, vector<1x9x3xf32>
    %143 = vector.shape_cast %142 : vector<1x9x3xf32> to vector<9x3xf32>
    %c3_141 = arith.constant 3 : index
    %c0_142 = arith.constant 0 : index
    %144 = vector.load %arg4[%c3_141, %c0_142] : memref<4x3xf32, #tpu.memory_space<vmem>>, vector<1x3xf32>
    %145 = vector.shape_cast %144 : vector<1x3xf32> to vector<3xf32>
    %c0_143 = arith.constant 0 : index
    %c1_144 = arith.constant 1 : index
    %c0_145 = arith.constant 0 : index
    %146 = vector.load %arg8[%c0_143, %c1_144, %c0_145] : memref<2x10x3xf32, #tpu.memory_space<vmem>>, vector<2x8x3xf32>
    tpu.vector_store %arg8[%c0_143, %c1_144, %c0_145], %141 {strides = array<i32>} : memref<2x10x3xf32, #tpu.memory_space<vmem>>, vector<2x8x3xf32>,
    %c0_146 = arith.constant 0 : index
    %c0_147 = arith.constant 0 : index
    %c0_148 = arith.constant 0 : index
    %147 = vector.load %arg8[%c0_146, %c0_147, %c0_148] : memref<2x10x3xf32, #tpu.memory_space<vmem>>, vector<2x8x3xf32>
    %c0_149 = arith.constant 0 : index
    %c0_150 = arith.constant 0 : index
    %c0_151 = arith.constant 0 : index
    %148 = vector.load %arg9[%c0_149, %c0_150, %c0_151] : memref<2x8x9xf32, #tpu.memory_space<vmem>>, vector<2x8x3xf32>
    tpu.vector_store %arg9[%c0_149, %c0_150, %c0_151], %147 {strides = array<i32>} : memref<2x8x9xf32, #tpu.memory_space<vmem>>, vector<2x8x3xf32>,
    %c0_152 = arith.constant 0 : index
    %c1_153 = arith.constant 1 : index
    %c0_154 = arith.constant 0 : index
    %149 = vector.load %arg8[%c0_152, %c1_153, %c0_154] : memref<2x10x3xf32, #tpu.memory_space<vmem>>, vector<2x8x3xf32>
    %c0_155 = arith.constant 0 : index
    %c0_156 = arith.constant 0 : index
    %c3_157 = arith.constant 3 : index
    %150 = vector.load %arg9[%c0_155, %c0_156, %c3_157] : memref<2x8x9xf32, #tpu.memory_space<vmem>>, vector<2x8x3xf32>
    tpu.vector_store %arg9[%c0_155, %c0_156, %c3_157], %149 {strides = array<i32>} : memref<2x8x9xf32, #tpu.memory_space<vmem>>, vector<2x8x3xf32>,
    %c0_158 = arith.constant 0 : index
    %c2_159 = arith.constant 2 : index
    %c0_160 = arith.constant 0 : index
    %151 = vector.load %arg8[%c0_158, %c2_159, %c0_160] : memref<2x10x3xf32, #tpu.memory_space<vmem>>, vector<2x8x3xf32>
    %c0_161 = arith.constant 0 : index
    %c0_162 = arith.constant 0 : index
    %c6_163 = arith.constant 6 : index
    %152 = vector.load %arg9[%c0_161, %c0_162, %c6_163] : memref<2x8x9xf32, #tpu.memory_space<vmem>>, vector<2x8x3xf32>
    tpu.vector_store %arg9[%c0_161, %c0_162, %c6_163], %151 {strides = array<i32>} : memref<2x8x9xf32, #tpu.memory_space<vmem>>, vector<2x8x3xf32>,
    %c0_164 = arith.constant 0 : index
    %c0_165 = arith.constant 0 : index
    %c0_166 = arith.constant 0 : index
    %153 = vector.load %arg9[%c0_164, %c0_165, %c0_166] : memref<2x8x9xf32, #tpu.memory_space<vmem>>, vector<2x8x9xf32>
    %154 = vector.shape_cast %153 : vector<2x8x9xf32> to vector<16x9xf32>
    %cst_167 = arith.constant dense<0.000000e+00> : vector<16x3xf32>
    %155 = tpu.matmul %154, %143, %cst_167 {dimension_numbers = #tpu.dot_dimension_numbers<[1], [0], [0], [1], [0, 0, 1, 1], [], []>} : vector<16x9xf32>, vector<9x3xf32>, vector<16x3xf32> -> vector<16x3xf32>
    %156 = vector.shape_cast %155 : vector<16x3xf32> to vector<2x8x3xf32>
    %157 = vector.shape_cast %145 : vector<3xf32> to vector<1x1x3xf32>
    %158 = vector.broadcast %157 : vector<1x1x3xf32> to vector<2x8x3xf32>
    %159 = arith.addf %156, %158 : vector<2x8x3xf32>
    %160 = arith.addf %159, %121 : vector<2x8x3xf32>
    %cst_168 = arith.constant 0.000000e+00 : f32
    %161 = vector.broadcast %cst_168 : f32 to vector<2x8x3xf32>
    %162 = arith.maximumf %160, %161 : vector<2x8x3xf32>
    %c0_169 = arith.constant 0 : index
    %c0_170 = arith.constant 0 : index
    %c0_171 = arith.constant 0 : index
    %163 = vector.load %arg5[%c0_169, %c0_170, %c0_171] : memref<2x8x3xf32, #tpu.memory_space<vmem>>, vector<2x8x3xf32>
    tpu.vector_store %arg5[%c0_169, %c0_170, %c0_171], %162 {strides = array<i32>} : memref<2x8x3xf32, #tpu.memory_space<vmem>>, vector<2x8x3xf32>,
    return
  }
}

</mosaic_0001>

<llo_original>
// kernel: inception_forward.1
$region0: #{inception_forward.1}
  #allocation0 [shape = 'u32[]', space=smem, size = 0x4, offset = 0x4, fixed_abs, tag = 'smem constant byte address 0x4 - core index']
  #allocation1 [shape = 'u32[72,128]{1,0:T(1,128)}', space=vmem, size = 0x9000, scoped, tag = 'internal scratch']
  #allocation2 [shape = 'f32[44,200]{1,0:T(8,128)}', space=vmem, size = 0xc000, scoped, tag = 'scratch operand']
  #allocation3 [shape = 'f32[2,18,3]{2,1,0:T(8,128)}', space=vmem, size = 0x6000, scoped, tag = 'scratch operand']
  #allocation4 [shape = 'f32[2,10,3]{2,1,0:T(8,128)}', space=vmem, size = 0x4000, scoped, tag = 'scratch operand']
  #allocation5 [shape = 'f32[2,8,9]{2,1,0:T(8,128)}', space=vmem, size = 0x2000, scoped, tag = 'scratch operand']
  %s0 = inlined_call_operand.vmem [shape: f32[2,16,200], index: 0, kind: input, shape index: {}]
  %s1 = inlined_call_operand.vmem [shape: bf16[200,21], index: 1, kind: input, shape index: {}]
  %s2 = inlined_call_operand.vmem [shape: f32[3,3], index: 2, kind: input, shape index: {}]
  %s3 = inlined_call_operand.vmem [shape: f32[4,9,3], index: 3, kind: input, shape index: {}]
  %s4 = inlined_call_operand.vmem [shape: f32[4,3], index: 4, kind: input, shape index: {}]
  %s5 = inlined_call_operand.vmem [shape: f32[2,8,3], index: 5, kind: output, shape index: {}]
  %s6 = sld [smem:[#allocation0]]
  $region30: #{inception_forward.1} parent=0
    _
  %s8 = ssub.s32 1, %s6
  %s9 = scalar_select 0, %s8, %s6
  // Predicated region
  $region2: #{inception_forward.1} parent=0 // pred_check
    _
  $region3: #{inception_forward.1} parent=0 // pred_check_branch
    %11 = sbr.rel (0) target = $region5
  $region4: #{inception_forward.1} parent=0 // pred_region
    _
  $region5: #{inception_forward.1} parent=0 // pred_fallthru
    _
  // Predicated region
  $region6: #{inception_forward.1} parent=0 // pred_check
    _
  $region7: #{inception_forward.1} parent=0 // pred_check_branch
    %13 = sbr.rel (0) target = $region9
  $region8: #{inception_forward.1} parent=0 // pred_region
    _
  $region9: #{inception_forward.1} parent=0 // pred_fallthru
    _
  // Predicated region
  $region10: #{inception_forward.1} parent=0 // pred_check
    _
  $region11: #{inception_forward.1} parent=0 // pred_check_branch
    %15 = sbr.rel (0) target = $region13
  $region12: #{inception_forward.1} parent=0 // pred_region
    _
  $region13: #{inception_forward.1} parent=0 // pred_fallthru
    _
  // Predicated region
  $region14: #{inception_forward.1} parent=0 // pred_check
    _
  $region15: #{inception_forward.1} parent=0 // pred_check_branch
    %17 = sbr.rel (0) target = $region17
  $region16: #{inception_forward.1} parent=0 // pred_region
    _
  $region17: #{inception_forward.1} parent=0 // pred_fallthru
    _
  // Predicated region
  $region18: #{inception_forward.1} parent=0 // pred_check
    _
  $region19: #{inception_forward.1} parent=0 // pred_check_branch
    %19 = sbr.rel (0) target = $region21
  $region20: #{inception_forward.1} parent=0 // pred_region
    _
  $region21: #{inception_forward.1} parent=0 // pred_fallthru
    _
  %v21 = vld [vmem:[%s2] sm:$0x1]
  %v22 = vld [vmem:[%s2 + $0x1] sm:$0x1]
  %v23 = vld [vmem:[%s2 + $0x2] sm:$0x1]
  %vm24 = vcmask 16384
  %25 = vst.msk [vmem:[#allocation3] sm:$0x1] %vm24, 0.0
  %26 = vst.msk [vmem:[#allocation3 + $0x18] sm:$0x1] %vm24, 0.0
  %27 = vst.msk [vmem:[#allocation3 + $0x11] sm:$0x1] %vm24, 0.0
  %28 = vst.msk [vmem:[#allocation3 + $0x29] sm:$0x1] %vm24, 0.0
  %29 = vst.msk [vmem:[#allocation4] sm:$0x1] %vm24, 0.0
  %30 = vst.msk [vmem:[#allocation4 + $0x10] sm:$0x1] %vm24, 0.0
  %31 = vst.msk [vmem:[#allocation4 + $0x9] sm:$0x1] %vm24, 0.0
  %32 = vst.msk [vmem:[#allocation4 + $0x19] sm:$0x1] %vm24, 0.0
  %33 = vst [vmem:[#allocation2] sm:$0x7] 0.0
  %vm34 = vcmask 583680
  %35 = vst.msk [vmem:[#allocation2 + $0x8] sm:$0x7] %vm34, 0.0
  %v36 = vld [vmem:[%s0] sm:$0xff]
  %v37 = vld [vmem:[%s0 + $0x8] sm:$0xff]
  %v38 = vld [vmem:[%s0 + $0x10] sm:$0xff]
  %v39 = vld [vmem:[%s0 + $0x18] sm:$0xff]
  %vm44 = vcmask 1042432
  %v45 = vrot.slane %v36, 5
  %v46 = vrot.slane %v37, 5
  %v47 = vrot.slane %v38, 5
  %v48 = vsel %vm44, %v45, %v47
  %v49 = vrot.slane %v39, 5
  %v50 = vsel %vm44, %v46, %v49
  %57 = vst [vmem:[#allocation2] sm:$0xf8] %v45
  %vm58 = vcmask 588803
  %59 = vst.msk [vmem:[#allocation2 + $0x8] sm:$0xf8] %vm58, %v46
  %60 = vst [vmem:[#allocation2 + $0x10] sm:$0xff] %v48
  %vm61 = vcmask 588800
  %62 = vst.msk [vmem:[#allocation2 + $0x18] sm:$0xff] %vm61, %v50
  %63 = vst [vmem:[#allocation2 + $0x20] sm:$0x7] %v47
  %64 = vst.msk [vmem:[#allocation2 + $0x28] sm:$0x7] %vm34, %v49
  %65 = vst [vmem:[#allocation2 + $0x20] sm:$0x38] 0.0
  %vm66 = vcmask 586755
  %67 = vst.msk [vmem:[#allocation2 + $0x28] sm:$0x38] %vm66, 0.0
  %68 = vst [vmem:[#allocation2 + $0x20] sm:$0xc0] 0.0
  %vm69 = vcmask 588806
  %70 = vst.msk [vmem:[#allocation2 + $0x28] sm:$0xc0] %vm69, 0.0
  %71 = vst [vmem:[#allocation2 + $0x30] sm:$0x1] 0.0
  %vm72 = vcmask 581632
  %73 = vst.msk [vmem:[#allocation2 + $0x38] sm:$0x1] %vm72, 0.0
  %s74 = scalar_lea.vmem %s0, 32
  %v75 = vld [vmem:[%s74] sm:$0xff]
  %v76 = vld [vmem:[%s74 + $0x8] sm:$0xff]
  %v77 = vld [vmem:[%s74 + $0x10] sm:$0xff]
  %v78 = vld [vmem:[%s74 + $0x18] sm:$0xff]
  %vm83 = vcmask 1040384
  %v84 = vrot.slane %v75, 7
  %v85 = vrot.slane %v76, 7
  %v86 = vrot.slane %v77, 7
  %v87 = vsel %vm83, %v84, %v86
  %v88 = vrot.slane %v78, 7
  %v89 = vsel %vm83, %v85, %v88
  %96 = vst [vmem:[#allocation2 + $0x30] sm:$0xfe] %v84
  %vm97 = vcmask 588801
  %98 = vst.msk [vmem:[#allocation2 + $0x38] sm:$0xfe] %vm97, %v85
  %99 = vst [vmem:[#allocation2 + $0x40] sm:$0xff] %v87
  %100 = vst.msk [vmem:[#allocation2 + $0x48] sm:$0xff] %vm61, %v89
  %101 = vst [vmem:[#allocation2 + $0x50] sm:$0x1] %v86
  %102 = vst.msk [vmem:[#allocation2 + $0x58] sm:$0x1] %vm72, %v88
  %103 = vst [vmem:[#allocation2 + $0x50] sm:$0xe] 0.0
  %vm104 = vcmask 584705
  %105 = vst.msk [vmem:[#allocation2 + $0x58] sm:$0xe] %vm104, 0.0
  %v106 = vld [vmem:[#allocation2] sm:$0xff]
  %v107 = vld [vmem:[#allocation2 + $0x8] sm:$0xff]
  %v108 = vld [vmem:[#allocation2 + $0x10] sm:$0xff]
  %v109 = vld [vmem:[#allocation2 + $0x18] sm:$0xff]
  %v110 = vld [vmem:[#allocation2 + $0x20] sm:$0xff]
  %v111 = vld [vmem:[#allocation2 + $0x28] sm:$0xff]
  %v112 = vld [vmem:[#allocation2 + $0x30] sm:$0xff]
  %v113 = vld [vmem:[#allocation2 + $0x38] sm:$0xff]
  %v114 = vld [vmem:[#allocation2 + $0x40] sm:$0xff]
  %v115 = vld [vmem:[#allocation2 + $0x48] sm:$0xff]
  %v116 = vld [vmem:[#allocation2 + $0x50] sm:$0xf]
  %v117 = vld [vmem:[#allocation2 + $0x58] sm:$0xf]
  %v118 = vpack.c.bf16 %v108, %v106
  %v119 = vpack.c.bf16 %v109, %v107
  %v120 = vpack.c.bf16 %v112, %v110
  %v121 = vpack.c.bf16 %v113, %v111
  %v122 = vpack.c.bf16 %v116, %v114
  %v123 = vpack.c.bf16 %v117, %v115
  %v124 = vld [vmem:[%s1] sm:$0xf]
  %v125 = vld [vmem:[%s1 + $0x4] sm:$0xf]
  %v126 = vld [vmem:[%s1 + $0x8] sm:$0xf]
  %v127 = vld [vmem:[%s1 + $0xc] sm:$0xf]
  %v128 = vld [vmem:[%s1 + $0x10] sm:$0xf]
  %v129 = vld [vmem:[%s1 + $0x14] sm:$0xf]
  %v130 = vld [vmem:[%s1 + $0x18] sm:$0xf]
  %v131 = vld [vmem:[%s1 + $0x1c] sm:$0xf]
  %v132 = vld [vmem:[%s1 + $0x20] sm:$0xf]
  %v133 = vld [vmem:[%s1 + $0x24] sm:$0xf]
  %v134 = vld [vmem:[%s1 + $0x28] sm:$0xf]
  %v135 = vld [vmem:[%s1 + $0x2c] sm:$0xf]
  %v136 = vld [vmem:[%s1 + $0x30] sm:$0xf]
  %v137 = vld [vmem:[%s1 + $0x34] sm:$0xf]
  %v138 = vld [vmem:[%s1 + $0x38] sm:$0xf]
  %v139 = vld [vmem:[%s1 + $0x3c] sm:$0xf]
  %v140 = vld [vmem:[%s1 + $0x40] sm:$0xf]
  %v141 = vld [vmem:[%s1 + $0x44] sm:$0xf]
  %v142 = vld [vmem:[%s1 + $0x48] sm:$0xf]
  %v143 = vld [vmem:[%s1 + $0x4c] sm:$0xf]
  %v144 = vld [vmem:[%s1 + $0x50] sm:$0xf]
  %v145 = vld [vmem:[%s1 + $0x54] sm:$0xf]
  %v146 = vld [vmem:[%s1 + $0x58] sm:$0xf]
  %v147 = vld [vmem:[%s1 + $0x5c] sm:$0xf]
  %v148 = vld [vmem:[%s1 + $0x60] sm:$0xf]
  %v174 = vunpack.c.l.b16 %v124
  %v175 = vunpack.c.l.b16 %v125
  %v176 = vunpack.c.l.b16 %v126
  %v177 = vunpack.c.l.b16 %v127
  %v178 = vunpack.c.l.b16 %v128
  %v179 = vunpack.c.l.b16 %v129
  %v180 = vunpack.c.l.b16 %v130
  %v181 = vunpack.c.l.b16 %v131
  %v182 = vunpack.c.l.b16 %v132
  %v183 = vunpack.c.l.b16 %v133
  %v184 = vunpack.c.l.b16 %v134
  %v185 = vunpack.c.l.b16 %v135
  %v186 = vunpack.c.l.b16 %v136
  %v187 = vunpack.c.l.b16 %v137
  %v188 = vunpack.c.l.b16 %v138
  %v189 = vunpack.c.l.b16 %v139
  %v190 = vunpack.c.l.b16 %v140
  %v191 = vunpack.c.l.b16 %v141
  %v192 = vunpack.c.l.b16 %v142
  %v193 = vunpack.c.l.b16 %v143
  %v194 = vunpack.c.l.b16 %v144
  %v195 = vunpack.c.l.b16 %v145
  %v196 = vunpack.c.l.b16 %v146
  %v197 = vunpack.c.l.b16 %v147
  %v198 = vunpack.c.l.b16 %v148
  %v199 = vpack.c.b16 %v175, %v174
  %v200 = vpack.c.b16 %v177, %v176
  %v201 = vpack.c.b16 %v179, %v178
  %v202 = vpack.c.b16 %v181, %v180
  %v203 = vpack.c.b16 %v183, %v182
  %v204 = vpack.c.b16 %v185, %v184
  %v205 = vpack.c.b16 %v187, %v186
  %v206 = vpack.c.b16 %v189, %v188
  %v207 = vpack.c.b16 %v191, %v190
  %v208 = vpack.c.b16 %v193, %v192
  %v209 = vpack.c.b16 %v195, %v194
  %v210 = vpack.c.b16 %v197, %v196
  %v211 = vpack.c.b16 %v198, %v198
  %v225 = vsel %vm61, %v119, 0
  %v228 = vsel %vm61, %v121, 0
  %v231 = vsel %vm61, %v123, 0
  %vm233 = vcmask 1043456
  %v235 = vsel %vm233, %v211, 0
  %237 = vmatpush.bf16.msra.mxu0 %v206
  %238 = vmatpush.bf16.msra.mxu0 %v205
  %239 = vmatpush.bf16.msra.mxu0 %v204
  %240 = vmatpush.bf16.msra.mxu0 %v203
  %241 = vmatpush.bf16.msra.mxu0 %v202
  %242 = vmatpush.bf16.msra.mxu0 %v201
  %243 = vmatpush.bf16.msra.mxu0 %v200
  %244 = vmatpush.bf16.msra.mxu0 %v199
  %245 = vmatmul.bf16.gmra.mxu0 %v118
  %v246 = vpop.f32.mrf.mxu0
  %v247 = vadd.f32 0.0, %v246
  %v248 = vpop.f32.mrf.mxu0
  %v249 = vadd.f32 0.0, %v248
  %250 = vmatmul.bf16.gmra.mxu0 %v120
  %v251 = vpop.f32.mrf.mxu0
  %v252 = vadd.f32 0.0, %v251
  %v253 = vpop.f32.mrf.mxu0
  %v254 = vadd.f32 0.0, %v253
  %255 = vmatmul.bf16.gmra.mxu0 %v122
  %v256 = vpop.f32.mrf.mxu0
  %v257 = vadd.f32 0.0, %v256
  %v258 = vpop.f32.mrf.mxu0
  %v259 = vadd.f32 0.0, %v258
  %260 = vdwg.mxu0
  %261 = vmatpush.bf16.msra.mxu0 0
  %262 = vmatpush.bf16.msra.mxu0 0
  %263 = vmatpush.bf16.msra.mxu0 0
  %264 = vmatpush.bf16.msra.mxu0 %v235
  %265 = vmatpush.bf16.msra.mxu0 %v210
  %266 = vmatpush.bf16.msra.mxu0 %v209
  %267 = vmatpush.bf16.msra.mxu0 %v208
  %268 = vmatpush.bf16.msra.mxu0 %v207
  %269 = vmatmul.bf16.gmra.mxu0 %v225
  %v270 = vpop.f32.mrf.mxu0
  %v271 = vadd.f32 %v247, %v270
  %v272 = vpop.f32.mrf.mxu0
  %v273 = vadd.f32 %v249, %v272
  %274 = vmatmul.bf16.gmra.mxu0 %v228
  %v275 = vpop.f32.mrf.mxu0
  %v276 = vadd.f32 %v252, %v275
  %v277 = vpop.f32.mrf.mxu0
  %v278 = vadd.f32 %v254, %v277
  %279 = vmatmul.bf16.gmra.mxu0 %v231
  %v280 = vpop.f32.mrf.mxu0
  %v281 = vadd.f32 %v257, %v280
  %v282 = vpop.f32.mrf.mxu0
  %v283 = vadd.f32 %v259, %v282
  %284 = vdwg.mxu0
  %v285 = vperm.slane %v21, 0
  %v286 = vadd.f32 %v285, %v271
  %v287 = vadd.f32 %v285, %v273
  %vm291 = vcmask 1046528
  %v292 = vrot.slane %v271, 1
  %v293 = vrot.slane %v273, 1
  %v294 = vsel %vm291, %v292, %v293
  %v295 = vrot.slane %v276, 1
  %v296 = vsel %vm291, %v293, %v295
  %297 = vrot.lane.b32.xlu0 %v294, 125
  %v298 = vpop.permute.xlu0 %297
  %299 = vrot.lane.b32.xlu0 %v296, 125
  %v300 = vpop.permute.xlu0 %299
  %v303 = vadd.f32 %v286, %v298
  %v304 = vadd.f32 %v287, %v300
  %vm305 = vcmask 1045504
  %v306 = vrot.slane %v271, 2
  %v307 = vrot.slane %v273, 2
  %v308 = vsel %vm305, %v306, %v307
  %v309 = vrot.slane %v276, 2
  %v310 = vsel %vm305, %v307, %v309
  %311 = vrot.lane.b32.xlu0 %v308, 122
  %v312 = vpop.permute.xlu0 %311
  %313 = vrot.lane.b32.xlu0 %v310, 122
  %v314 = vpop.permute.xlu0 %313
  %v317 = vadd.f32 %v303, %v312
  %v318 = vadd.f32 %v304, %v314
  %vm319 = vcmask 1044480
  %v320 = vrot.slane %v271, 3
  %v321 = vrot.slane %v273, 3
  %v322 = vsel %vm319, %v320, %v321
  %v323 = vrot.slane %v276, 3
  %v324 = vsel %vm319, %v321, %v323
  %325 = vrot.lane.b32.xlu0 %v322, 119
  %v326 = vpop.permute.xlu0 %325
  %327 = vrot.lane.b32.xlu0 %v324, 119
  %v328 = vpop.permute.xlu0 %327
  %v331 = vadd.f32 %v317, %v326
  %v332 = vadd.f32 %v318, %v328
  %v333 = vrot.slane %v271, 4
  %v334 = vrot.slane %v273, 4
  %v335 = vsel %vm233, %v333, %v334
  %v336 = vrot.slane %v276, 4
  %v337 = vsel %vm233, %v334, %v336
  %338 = vrot.lane.b32.xlu0 %v335, 116
  %v339 = vpop.permute.xlu0 %338
  %340 = vrot.lane.b32.xlu0 %v337, 116
  %v341 = vpop.permute.xlu0 %340
  %v344 = vadd.f32 %v331, %v339
  %v345 = vadd.f32 %v332, %v341
  %v346 = vrot.slane %v271, 5
  %v347 = vrot.slane %v273, 5
  %v348 = vsel %vm44, %v346, %v347
  %v349 = vrot.slane %v276, 5
  %v350 = vsel %vm44, %v347, %v349
  %351 = vrot.lane.b32.xlu0 %v348, 113
  %v352 = vpop.permute.xlu0 %351
  %353 = vrot.lane.b32.xlu0 %v350, 113
  %v354 = vpop.permute.xlu0 %353
  %v357 = vadd.f32 %v344, %v352
  %v358 = vadd.f32 %v345, %v354
  %vm359 = vcmask 1041408
  %v360 = vrot.slane %v271, 6
  %v361 = vrot.slane %v273, 6
  %v362 = vsel %vm359, %v360, %v361
  %v363 = vrot.slane %v276, 6
  %v364 = vsel %vm359, %v361, %v363
  %365 = vrot.lane.b32.xlu0 %v362, 110
  %v366 = vpop.permute.xlu0 %365
  %367 = vrot.lane.b32.xlu0 %v364, 110
  %v368 = vpop.permute.xlu0 %367
  %v371 = vadd.f32 %v357, %v366
  %v372 = vadd.f32 %v358, %v368
  %v373 = vmax.f32 %v371, 0.0
  %v374 = vmax.f32 %v372, 0.0
  %vm375 = vcmask 23552
  %376 = vst.msk [vmem:[#allocation3 + $0x1] sm:$0xff] %vm375, %v373
  %377 = vst.msk [vmem:[#allocation3 + $0x9] sm:$0xff] %vm375, %v374
  %v378 = vadd.f32 %v285, %v276
  %v379 = vadd.f32 %v285, %v278
  %v380 = vadd.f32 %v285, %v281
  %v383 = vrot.slane %v278, 1
  %v384 = vsel %vm291, %v295, %v383
  %v385 = vrot.slane %v281, 1
  %v386 = vsel %vm291, %v383, %v385
  %387 = vrot.lane.b32.xlu0 %v384, 125
  %v388 = vpop.permute.xlu0 %387
  %389 = vrot.lane.b32.xlu0 %v386, 125
  %v390 = vpop.permute.xlu0 %389
  %391 = vrot.lane.b32.xlu0 %v385, 125
  %v392 = vpop.permute.xlu0 %391
  %v396 = vadd.f32 %v378, %v388
  %v397 = vadd.f32 %v379, %v390
  %v398 = vadd.f32 %v380, %v392
  %v399 = vrot.slane %v278, 2
  %v400 = vrot.slane %v281, 2
  %v401 = vsel %vm305, %v399, %v400
  %402 = vrot.lane.b32.xlu0 %v399, 122
  %v403 = vpop.permute.xlu0 %402
  %404 = vrot.lane.b32.xlu0 %v401, 122
  %v405 = vpop.permute.xlu0 %404
  %406 = vrot.lane.b32.xlu0 %v400, 122
  %v407 = vpop.permute.xlu0 %406
  %v411 = vadd.f32 %v396, %v403
  %v412 = vadd.f32 %v397, %v405
  %v413 = vadd.f32 %v398, %v407
  %v415 = vrot.slane %v278, 3
  %v416 = vrot.slane %v281, 3
  %v417 = vsel %vm319, %v415, %v416
  %v418 = vrot.slane %v283, 3
  %v419 = vsel %vm319, %v416, %v418
  %420 = vrot.lane.b32.xlu0 %v415, 119
  %v421 = vpop.permute.xlu0 %420
  %422 = vrot.lane.b32.xlu0 %v417, 119
  %v423 = vpop.permute.xlu0 %422
  %424 = vrot.lane.b32.xlu0 %v419, 119
  %v425 = vpop.permute.xlu0 %424
  %v429 = vadd.f32 %v411, %v421
  %v430 = vadd.f32 %v412, %v423
  %v431 = vadd.f32 %v413, %v425
  %v432 = vrot.slane %v278, 4
  %v433 = vrot.slane %v281, 4
  %v434 = vsel %vm233, %v432, %v433
  %v435 = vrot.slane %v283, 4
  %v436 = vsel %vm233, %v433, %v435
  %437 = vrot.lane.b32.xlu0 %v432, 116
  %v438 = vpop.permute.xlu0 %437
  %439 = vrot.lane.b32.xlu0 %v434, 116
  %v440 = vpop.permute.xlu0 %439
  %441 = vrot.lane.b32.xlu0 %v436, 116
  %v442 = vpop.permute.xlu0 %441
  %v446 = vadd.f32 %v429, %v438
  %v447 = vadd.f32 %v430, %v440
  %v448 = vadd.f32 %v431, %v442
  %v449 = vrot.slane %v278, 5
  %v450 = vrot.slane %v281, 5
  %v451 = vsel %vm44, %v449, %v450
  %v452 = vrot.slane %v283, 5
  %v453 = vsel %vm44, %v450, %v452
  %454 = vrot.lane.b32.xlu0 %v449, 113
  %v455 = vpop.permute.xlu0 %454
  %456 = vrot.lane.b32.xlu0 %v451, 113
  %v457 = vpop.permute.xlu0 %456
  %458 = vrot.lane.b32.xlu0 %v453, 113
  %v459 = vpop.permute.xlu0 %458
  %v463 = vadd.f32 %v446, %v455
  %v464 = vadd.f32 %v447, %v457
  %v465 = vadd.f32 %v448, %v459
  %v466 = vrot.slane %v278, 6
  %v467 = vrot.slane %v281, 6
  %v468 = vsel %vm359, %v466, %v467
  %v469 = vrot.slane %v283, 6
  %v470 = vsel %vm359, %v467, %v469
  %471 = vrot.lane.b32.xlu0 %v466, 110
  %v472 = vpop.permute.xlu0 %471
  %473 = vrot.lane.b32.xlu0 %v468, 110
  %v474 = vpop.permute.xlu0 %473
  %475 = vrot.lane.b32.xlu0 %v470, 110
  %v476 = vpop.permute.xlu0 %475
  %v480 = vadd.f32 %v463, %v472
  %v481 = vadd.f32 %v464, %v474
  %v482 = vadd.f32 %v465, %v476
  %v483 = vmax.f32 %v480, 0.0
  %v484 = vmax.f32 %v481, 0.0
  %v485 = vmax.f32 %v482, 0.0
  %s486 = scalar_lea.vmem [#allocation3], 24
  %vm487 = vcmask 23558
  %488 = vst.msk [vmem:[%s486 - $0x5] sm:$0xc0] %vm487, %v483
  %489 = vst.msk [vmem:[%s486 + $0x3] sm:$0xff] %vm375, %v484
  %vm490 = vcmask 21504
  %491 = vst.msk [vmem:[%s486 + $0xb] sm:$0x3f] %vm490, %v485
  %v492 = vld [vmem:[#allocation3] sm:$0xff]
  %v493 = vld [vmem:[#allocation3 + $0x8] sm:$0xff]
  %v494 = vld [vmem:[#allocation3 + $0x18] sm:$0xff]
  %v495 = vld [vmem:[#allocation3 + $0x20] sm:$0xff]
  %v496 = vld [vmem:[#allocation3 + $0x1] sm:$0xff]
  %v497 = vld [vmem:[#allocation3 + $0x9] sm:$0xff]
  %v498 = vld [vmem:[#allocation3 + $0x19] sm:$0xff]
  %v499 = vld [vmem:[#allocation3 + $0x21] sm:$0xff]
  %v500 = vmax.f32 %v492, %v496
  %v501 = vmax.f32 %v493, %v497
  %v502 = vmax.f32 %v494, %v498
  %v503 = vmax.f32 %v495, %v499
  %v508 = vrot.slane %v500, 2
  %v509 = vrot.slane %v500, 4
  %v510 = vrot.slane %v500, 6
  %v511 = vrot.slane %v501, 2
  %v512 = vrot.slane %v501, 4
  %v513 = vrot.slane %v501, 6
  %v514 = vrot.slane %v502, 2
  %v515 = vrot.slane %v502, 4
  %v516 = vrot.slane %v502, 6
  %v517 = vrot.slane %v503, 2
  %v518 = vrot.slane %v503, 4
  %v519 = vrot.slane %v503, 6
  %v532 = vrot.slane %v500, 7
  %v533 = vrot.slane %v532, 2
  %v534 = vrot.slane %v508, 7
  %v535 = vrot.slane %v534, 2
  %v536 = vrot.slane %v509, 7
  %v537 = vrot.slane %v536, 2
  %v538 = vrot.slane %v510, 7
  %v539 = vrot.slane %v538, 2
  %v540 = vrot.slane %v501, 7
  %v541 = vrot.slane %v540, 2
  %v542 = vrot.slane %v511, 7
  %v543 = vrot.slane %v542, 2
  %v544 = vrot.slane %v512, 7
  %v545 = vrot.slane %v544, 2
  %v546 = vrot.slane %v513, 7
  %v547 = vrot.slane %v546, 2
  %v548 = vrot.slane %v502, 7
  %v549 = vrot.slane %v548, 2
  %v550 = vrot.slane %v514, 7
  %v551 = vrot.slane %v550, 2
  %v552 = vrot.slane %v515, 7
  %v553 = vrot.slane %v552, 2
  %v554 = vrot.slane %v516, 7
  %v555 = vrot.slane %v554, 2
  %v556 = vrot.slane %v503, 7
  %v557 = vrot.slane %v556, 2
  %v558 = vrot.slane %v517, 7
  %v559 = vrot.slane %v558, 2
  %v560 = vrot.slane %v518, 7
  %v561 = vrot.slane %v560, 2
  %v562 = vrot.slane %v519, 7
  %v563 = vrot.slane %v562, 2
  %v580 = vmax.f32 %v500, %v533
  %v581 = vmax.f32 %v508, %v535
  %v582 = vmax.f32 %v509, %v537
  %v583 = vmax.f32 %v510, %v539
  %v584 = vmax.f32 %v501, %v541
  %v585 = vmax.f32 %v511, %v543
  %v586 = vmax.f32 %v512, %v545
  %v587 = vmax.f32 %v513, %v547
  %v588 = vmax.f32 %v502, %v549
  %v589 = vmax.f32 %v514, %v551
  %v590 = vmax.f32 %v515, %v553
  %v591 = vmax.f32 %v516, %v555
  %v592 = vmax.f32 %v503, %v557
  %v593 = vmax.f32 %v517, %v559
  %v594 = vmax.f32 %v518, %v561
  %v595 = vmax.f32 %v519, %v563
  %v596 = vperm.slane %v22, 0
  %v598 = vrot.slane %v596, 2
  %v599 = vrot.slane %v596, 4
  %v600 = vrot.slane %v596, 6
  %v601 = vrot.slane %v596, 1
  %v602 = vrot.slane %v598, 1
  %v603 = vrot.slane %v599, 1
  %v604 = vrot.slane %v600, 1
  %v613 = vmul.f32 %v580, %v596
  %v614 = vmul.f32 %v581, %v601
  %v615 = vmul.f32 %v582, %v598
  %v616 = vmul.f32 %v583, %v602
  %v617 = vmul.f32 %v584, %v599
  %v618 = vmul.f32 %v585, %v603
  %v619 = vmul.f32 %v586, %v600
  %v620 = vmul.f32 %v587, %v604
  %v621 = vmul.f32 %v588, %v596
  %v622 = vmul.f32 %v589, %v601
  %v623 = vmul.f32 %v590, %v598
  %v624 = vmul.f32 %v591, %v602
  %v625 = vmul.f32 %v592, %v599
  %v626 = vmul.f32 %v593, %v603
  %v627 = vmul.f32 %v594, %v600
  %v628 = vmul.f32 %v595, %v604
  %v629 = vperm.slane %v23, 0
  %v631 = vrot.slane %v629, 2
  %v632 = vrot.slane %v629, 4
  %v633 = vrot.slane %v629, 6
  %v634 = vrot.slane %v629, 1
  %v635 = vrot.slane %v631, 1
  %v636 = vrot.slane %v632, 1
  %v637 = vrot.slane %v633, 1
  %v646 = vadd.f32 %v613, %v629
  %v647 = vadd.f32 %v614, %v634
  %v648 = vadd.f32 %v615, %v631
  %v649 = vadd.f32 %v616, %v635
  %v650 = vadd.f32 %v617, %v632
  %v651 = vadd.f32 %v618, %v636
  %v652 = vadd.f32 %v619, %v633
  %v653 = vadd.f32 %v620, %v637
  %v654 = vadd.f32 %v621, %v629
  %v655 = vadd.f32 %v622, %v634
  %v656 = vadd.f32 %v623, %v631
  %v657 = vadd.f32 %v624, %v635
  %v658 = vadd.f32 %v625, %v632
  %v659 = vadd.f32 %v626, %v636
  %v660 = vadd.f32 %v627, %v633
  %v661 = vadd.f32 %v628, %v637
  %v662 = vld [vmem:[%s3] sm:$0xff]
  %v663 = vld [vmem:[%s3 + $0x8] sm:$0x1]
  %v664 = vld [vmem:[%s4] sm:$0x1]
  %v681 = vperm.slane %v646, 0
  %v682 = vperm.slane %v647, 0
  %v683 = vperm.slane %v648, 0
  %v684 = vperm.slane %v649, 0
  %v685 = vperm.slane %v650, 0
  %v686 = vperm.slane %v651, 0
  %v687 = vperm.slane %v652, 0
  %v688 = vperm.slane %v653, 0
  %v689 = vperm.slane %v654, 0
  %v690 = vperm.slane %v655, 0
  %v691 = vperm.slane %v656, 0
  %v692 = vperm.slane %v657, 0
  %v693 = vperm.slane %v658, 0
  %v694 = vperm.slane %v659, 0
  %v695 = vperm.slane %v660, 0
  %v696 = vperm.slane %v661, 0
  %vm697 = vcmask 1041409
  %v698 = vsel %vm697, %v682, %v681
  %vm699 = vcmask 1042434
  %v700 = vsel %vm699, %v683, %v698
  %vm701 = vcmask 1043459
  %v702 = vsel %vm701, %v684, %v700
  %vm703 = vcmask 1044484
  %v704 = vsel %vm703, %v685, %v702
  %vm705 = vcmask 1045509
  %v706 = vsel %vm705, %v686, %v704
  %vm707 = vcmask 1046534
  %v708 = vsel %vm707, %v687, %v706
  %vm709 = vcmask 1047559
  %v710 = vsel %vm709, %v688, %v708
  %v711 = vsel %vm697, %v690, %v689
  %v712 = vsel %vm699, %v691, %v711
  %v713 = vsel %vm701, %v692, %v712
  %v714 = vsel %vm703, %v693, %v713
  %v715 = vsel %vm705, %v694, %v714
  %v716 = vsel %vm707, %v695, %v715
  %v717 = vsel %vm709, %v696, %v716
  %720 = vst.msk [vmem:[#allocation4 + $0x1] sm:$0xff] %vm375, %v710
  %721 = vst.msk [vmem:[#allocation4 + $0x11] sm:$0xff] %vm375, %v717
  %v722 = vld [vmem:[#allocation4] sm:$0xff]
  %v723 = vld [vmem:[#allocation4 + $0x10] sm:$0xff]
  %724 = vst.msk [vmem:[#allocation5] sm:$0xff] %vm375, %v722
  %725 = vst.msk [vmem:[#allocation5 + $0x8] sm:$0xff] %vm375, %v723
  %v726 = vld [vmem:[#allocation4 + $0x1] sm:$0xff]
  %v727 = vld [vmem:[#allocation4 + $0x11] sm:$0xff]
  %730 = vrot.lane.b32.xlu0 %v726, 3
  %v731 = vpop.permute.xlu0 %730
  %732 = vrot.lane.b32.xlu0 %v727, 3
  %v733 = vpop.permute.xlu0 %732
  %vm736 = vcmask 48152
  %737 = vst.msk [vmem:[#allocation5] sm:$0xff] %vm736, %v731
  %738 = vst.msk [vmem:[#allocation5 + $0x8] sm:$0xff] %vm736, %v733
  %v739 = vld [vmem:[#allocation4 + $0x2] sm:$0xff]
  %v740 = vld [vmem:[#allocation4 + $0x12] sm:$0xff]
  %743 = vrot.lane.b32.xlu0 %v739, 6
  %v744 = vpop.permute.xlu0 %743
  %745 = vrot.lane.b32.xlu0 %v740, 6
  %v746 = vpop.permute.xlu0 %745
  %vm749 = vcmask 72752
  %750 = vst.msk [vmem:[#allocation5] sm:$0xff] %vm749, %v744
  %751 = vst.msk [vmem:[#allocation5 + $0x8] sm:$0xff] %vm749, %v746
  %v752 = vld [vmem:[#allocation5] sm:$0xff]
  %v753 = vld [vmem:[#allocation5 + $0x8] sm:$0xff]
  %vm754 = vcmask 72704
  %v756 = vsel %vm754, %v752, 0
  %v759 = vsel %vm754, %v753, 0
  %v762 = vsel %vm83, %v663, 0
  %764 = vmatpush.msra.mxu0 0.0
  %765 = vmatpush.msra.mxu0 0.0
  %766 = vmatpush.msra.mxu0 0.0
  %767 = vmatpush.msra.mxu0 0.0
  %768 = vmatpush.msra.mxu0 0.0
  %769 = vmatpush.msra.mxu0 0.0
  %770 = vmatpush.msra.mxu0 0.0
  %771 = vmatpush.msra.mxu0 0.0
  %772 = vmatpush.msra.mxu0 0.0
  %773 = vmatpush.msra.mxu0 0.0
  %774 = vmatpush.msra.mxu0 0.0
  %775 = vmatpush.msra.mxu0 0.0
  %776 = vmatpush.msra.mxu0 0.0
  %777 = vmatpush.msra.mxu0 0.0
  %778 = vmatpush.msra.mxu0 %v762
  %779 = vmatpush.msra.mxu0 %v662
  %780 = vmatmul.f32.gmra.mxu0 %v756
  %v781 = vpop.f32.mrf.mxu0
  %v782 = vadd.f32 0.0, %v781
  %783 = vmatmul.f32.gmra.mxu0 %v759
  %v784 = vpop.f32.mrf.mxu0
  %v785 = vadd.f32 0.0, %v784
  %786 = vdwg.mxu0
  %v787 = vperm.slane %v664, 0
  %v788 = vadd.f32 %v782, %v787
  %v789 = vadd.f32 %v785, %v787
  %v790 = vmax.f32 %v788, 0.0
  %v791 = vmax.f32 %v789, 0.0
  %s792 = scalar_lea.vmem %s3, 16
  %v793 = vld [vmem:[%s792] sm:$0xff]
  %v794 = vld [vmem:[%s792 + $0x8] sm:$0x1]
  %v795 = vld [vmem:[%s4 + $0x1] sm:$0x1]
  %796 = vst.msk [vmem:[#allocation4 + $0x1] sm:$0xff] %vm375, %v790
  %797 = vst.msk [vmem:[#allocation4 + $0x11] sm:$0xff] %vm375, %v791
  %v798 = vld [vmem:[#allocation4] sm:$0xff]
  %v799 = vld [vmem:[#allocation4 + $0x10] sm:$0xff]
  %800 = vst.msk [vmem:[#allocation5] sm:$0xff] %vm375, %v798
  %801 = vst.msk [vmem:[#allocation5 + $0x8] sm:$0xff] %vm375, %v799
  %v802 = vld [vmem:[#allocation4 + $0x1] sm:$0xff]
  %v803 = vld [vmem:[#allocation4 + $0x11] sm:$0xff]
  %806 = vrot.lane.b32.xlu0 %v802, 3
  %v807 = vpop.permute.xlu0 %806
  %808 = vrot.lane.b32.xlu0 %v803, 3
  %v809 = vpop.permute.xlu0 %808
  %812 = vst.msk [vmem:[#allocation5] sm:$0xff] %vm736, %v807
  %813 = vst.msk [vmem:[#allocation5 + $0x8] sm:$0xff] %vm736, %v809
  %v814 = vld [vmem:[#allocation4 + $0x2] sm:$0xff]
  %v815 = vld [vmem:[#allocation4 + $0x12] sm:$0xff]
  %818 = vrot.lane.b32.xlu0 %v814, 6
  %v819 = vpop.permute.xlu0 %818
  %820 = vrot.lane.b32.xlu0 %v815, 6
  %v821 = vpop.permute.xlu0 %820
  %824 = vst.msk [vmem:[#allocation5] sm:$0xff] %vm749, %v819
  %825 = vst.msk [vmem:[#allocation5 + $0x8] sm:$0xff] %vm749, %v821
  %v826 = vld [vmem:[#allocation5] sm:$0xff]
  %v827 = vld [vmem:[#allocation5 + $0x8] sm:$0xff]
  %v829 = vsel %vm754, %v826, 0
  %v832 = vsel %vm754, %v827, 0
  %v835 = vsel %vm83, %v794, 0
  %837 = vmatpush.msra.mxu0 0.0
  %838 = vmatpush.msra.mxu0 0.0
  %839 = vmatpush.msra.mxu0 0.0
  %840 = vmatpush.msra.mxu0 0.0
  %841 = vmatpush.msra.mxu0 0.0
  %842 = vmatpush.msra.mxu0 0.0
  %843 = vmatpush.msra.mxu0 0.0
  %844 = vmatpush.msra.mxu0 0.0
  %845 = vmatpush.msra.mxu0 0.0
  %846 = vmatpush.msra.mxu0 0.0
  %847 = vmatpush.msra.mxu0 0.0
  %848 = vmatpush.msra.mxu0 0.0
  %849 = vmatpush.msra.mxu0 0.0
  %850 = vmatpush.msra.mxu0 0.0
  %851 = vmatpush.msra.mxu0 %v835
  %852 = vmatpush.msra.mxu0 %v793
  %853 = vmatmul.f32.gmra.mxu0 %v829
  %v854 = vpop.f32.mrf.mxu0
  %v855 = vadd.f32 0.0, %v854
  %856 = vmatmul.f32.gmra.mxu0 %v832
  %v857 = vpop.f32.mrf.mxu0
  %v858 = vadd.f32 0.0, %v857
  %859 = vdwg.mxu0
  %v860 = vperm.slane %v795, 0
  %v861 = vadd.f32 %v855, %v860
  %v862 = vadd.f32 %v858, %v860
  %v863 = vadd.f32 %v861, %v710
  %v864 = vadd.f32 %v862, %v717
  %v865 = vmax.f32 %v863, 0.0
  %v866 = vmax.f32 %v864, 0.0
  %s867 = scalar_lea.vmem %s3, 32
  %v868 = vld [vmem:[%s867] sm:$0xff]
  %v869 = vld [vmem:[%s867 + $0x8] sm:$0x1]
  %v870 = vld [vmem:[%s4 + $0x2] sm:$0x1]
  %871 = vst.msk [vmem:[#allocation4 + $0x1] sm:$0xff] %vm375, %v865
  %872 = vst.msk [vmem:[#allocation4 + $0x11] sm:$0xff] %vm375, %v866
  %v873 = vld [vmem:[#allocation4] sm:$0xff]
  %v874 = vld [vmem:[#allocation4 + $0x10] sm:$0xff]
  %875 = vst.msk [vmem:[#allocation5] sm:$0xff] %vm375, %v873
  %876 = vst.msk [vmem:[#allocation5 + $0x8] sm:$0xff] %vm375, %v874
  %v877 = vld [vmem:[#allocation4 + $0x1] sm:$0xff]
  %v878 = vld [vmem:[#allocation4 + $0x11] sm:$0xff]
  %881 = vrot.lane.b32.xlu0 %v877, 3
  %v882 = vpop.permute.xlu0 %881
  %883 = vrot.lane.b32.xlu0 %v878, 3
  %v884 = vpop.permute.xlu0 %883
  %887 = vst.msk [vmem:[#allocation5] sm:$0xff] %vm736, %v882
  %888 = vst.msk [vmem:[#allocation5 + $0x8] sm:$0xff] %vm736, %v884
  %v889 = vld [vmem:[#allocation4 + $0x2] sm:$0xff]
  %v890 = vld [vmem:[#allocation4 + $0x12] sm:$0xff]
  %893 = vrot.lane.b32.xlu0 %v889, 6
  %v894 = vpop.permute.xlu0 %893
  %895 = vrot.lane.b32.xlu0 %v890, 6
  %v896 = vpop.permute.xlu0 %895
  %899 = vst.msk [vmem:[#allocation5] sm:$0xff] %vm749, %v894
  %900 = vst.msk [vmem:[#allocation5 + $0x8] sm:$0xff] %vm749, %v896
  %v901 = vld [vmem:[#allocation5] sm:$0xff]
  %v902 = vld [vmem:[#allocation5 + $0x8] sm:$0xff]
  %v904 = vsel %vm754, %v901, 0
  %v907 = vsel %vm754, %v902, 0
  %v910 = vsel %vm83, %v869, 0
  %912 = vmatpush.msra.mxu0 0.0
  %913 = vmatpush.msra.mxu0 0.0
  %914 = vmatpush.msra.mxu0 0.0
  %915 = vmatpush.msra.mxu0 0.0
  %916 = vmatpush.msra.mxu0 0.0
  %917 = vmatpush.msra.mxu0 0.0
  %918 = vmatpush.msra.mxu0 0.0
  %919 = vmatpush.msra.mxu0 0.0
  %920 = vmatpush.msra.mxu0 0.0
  %921 = vmatpush.msra.mxu0 0.0
  %922 = vmatpush.msra.mxu0 0.0
  %923 = vmatpush.msra.mxu0 0.0
  %924 = vmatpush.msra.mxu0 0.0
  %925 = vmatpush.msra.mxu0 0.0
  %926 = vmatpush.msra.mxu0 %v910
  %927 = vmatpush.msra.mxu0 %v868
  %928 = vmatmul.f32.gmra.mxu0 %v904
  %v929 = vpop.f32.mrf.mxu0
  %v930 = vadd.f32 0.0, %v929
  %931 = vmatmul.f32.gmra.mxu0 %v907
  %v932 = vpop.f32.mrf.mxu0
  %v933 = vadd.f32 0.0, %v932
  %934 = vdwg.mxu0
  %v935 = vperm.slane %v870, 0
  %v936 = vadd.f32 %v930, %v935
  %v937 = vadd.f32 %v933, %v935
  %v938 = vmax.f32 %v936, 0.0
  %v939 = vmax.f32 %v937, 0.0
  %s940 = scalar_lea.vmem %s3, 48
  %v941 = vld [vmem:[%s940] sm:$0xff]
  %v942 = vld [vmem:[%s940 + $0x8] sm:$0x1]
  %v943 = vld [vmem:[%s4 + $0x3] sm:$0x1]
  %944 = vst.msk [vmem:[#allocation4 + $0x1] sm:$0xff] %vm375, %v938
  %945 = vst.msk [vmem:[#allocation4 + $0x11] sm:$0xff] %vm375, %v939
  %v946 = vld [vmem:[#allocation4] sm:$0xff]
  %v947 = vld [vmem:[#allocation4 + $0x10] sm:$0xff]
  %948 = vst.msk [vmem:[#allocation5] sm:$0xff] %vm375, %v946
  %949 = vst.msk [vmem:[#allocation5 + $0x8] sm:$0xff] %vm375, %v947
  %v950 = vld [vmem:[#allocation4 + $0x1] sm:$0xff]
  %v951 = vld [vmem:[#allocation4 + $0x11] sm:$0xff]
  %954 = vrot.lane.b32.xlu0 %v950, 3
  %v955 = vpop.permute.xlu0 %954
  %956 = vrot.lane.b32.xlu0 %v951, 3
  %v957 = vpop.permute.xlu0 %956
  %960 = vst.msk [vmem:[#allocation5] sm:$0xff] %vm736, %v955
  %961 = vst.msk [vmem:[#allocation5 + $0x8] sm:$0xff] %vm736, %v957
  %v962 = vld [vmem:[#allocation4 + $0x2] sm:$0xff]
  %v963 = vld [vmem:[#allocation4 + $0x12] sm:$0xff]
  %966 = vrot.lane.b32.xlu0 %v962, 6
  %v967 = vpop.permute.xlu0 %966
  %968 = vrot.lane.b32.xlu0 %v963, 6
  %v969 = vpop.permute.xlu0 %968
  %972 = vst.msk [vmem:[#allocation5] sm:$0xff] %vm749, %v967
  %973 = vst.msk [vmem:[#allocation5 + $0x8] sm:$0xff] %vm749, %v969
  %v974 = vld [vmem:[#allocation5] sm:$0xff]
  %v975 = vld [vmem:[#allocation5 + $0x8] sm:$0xff]
  %v977 = vsel %vm754, %v974, 0
  %v980 = vsel %vm754, %v975, 0
  %v983 = vsel %vm83, %v942, 0
  %985 = vmatpush.msra.mxu0 0.0
  %986 = vmatpush.msra.mxu0 0.0
  %987 = vmatpush.msra.mxu0 0.0
  %988 = vmatpush.msra.mxu0 0.0
  %989 = vmatpush.msra.mxu0 0.0
  %990 = vmatpush.msra.mxu0 0.0
  %991 = vmatpush.msra.mxu0 0.0
  %992 = vmatpush.msra.mxu0 0.0
  %993 = vmatpush.msra.mxu0 0.0
  %994 = vmatpush.msra.mxu0 0.0
  %995 = vmatpush.msra.mxu0 0.0
  %996 = vmatpush.msra.mxu0 0.0
  %997 = vmatpush.msra.mxu0 0.0
  %998 = vmatpush.msra.mxu0 0.0
  %999 = vmatpush.msra.mxu0 %v983
  %1000 = vmatpush.msra.mxu0 %v941
  %1001 = vmatmul.f32.gmra.mxu0 %v977
  %v1002 = vpop.f32.mrf.mxu0
  %v1003 = vadd.f32 0.0, %v1002
  %1004 = vmatmul.f32.gmra.mxu0 %v980
  %v1005 = vpop.f32.mrf.mxu0
  %v1006 = vadd.f32 0.0, %v1005
  %1007 = vdwg.mxu0
  %v1008 = vperm.slane %v943, 0
  %v1009 = vadd.f32 %v1003, %v1008
  %v1010 = vadd.f32 %v1006, %v1008
  %v1011 = vadd.f32 %v1009, %v865
  %v1012 = vadd.f32 %v1010, %v866
  %v1013 = vmax.f32 %v1011, 0.0
  %v1014 = vmax.f32 %v1012, 0.0
  %1015 = vst.msk [vmem:[%s5] sm:$0xff] %vm375, %v1013
  %1016 = vst.msk [vmem:[%s5 + $0x8] sm:$0xff] %vm375, %v1014
  // Predicated region
  $region22: #{inception_forward.1} parent=0 // pred_check
    _
  $region23: #{inception_forward.1} parent=0 // pred_check_branch
    %1018 = sbr.rel (0) target = $region25
  $region24: #{inception_forward.1} parent=0 // pred_region
    _
  $region25: #{inception_forward.1} parent=0 // pred_fallthru
    _
  // Predicated region
  $region26: #{inception_forward.1} parent=0 // pred_check
    _
  $region27: #{inception_forward.1} parent=0 // pred_check_branch
    %1020 = sbr.rel (0) target = $region29
  $region28: #{inception_forward.1} parent=0 // pred_region
    _
  $region29: #{inception_forward.1} parent=0 // pred_fallthru
    _

</llo_original>
